<compile_context>
chip_gen: v7x
topology: tpu7x:2x2x1
jax: 0.10.0
libtpu: 0.0.40
codegen_flags: <defaults>
</compile_context>

<pallas_src>
import jax
import jax.numpy as jnp
from jax.experimental import pallas as pl
from jax.experimental.pallas import tpu as pltpu

EPS = 1e-5
_MiB = 1024 * 1024
_LANE = 128
_SUBLANE = 8
_MAX_TILE_D = 2048          # lanes


# --------------------------------------------------------------------------- #
# helpers
# --------------------------------------------------------------------------- #
def _round_up(v, m):
    return ((v + m - 1) // m) * m


def _cdiv(a, b):
    return -(-a // b)


def _vmem_budgets():
    """(tile-sizing budget, vmem_limit_bytes cap) — generation aware."""
    try:
        cap = int(pltpu.get_tpu_info().vmem_capacity_bytes)
    except Exception:
        cap = 64 * _MiB                      # conservative (v7x-sized) fallback
    if cap >= 128 * _MiB:                    # v5e / v6e: 128 MiB physical VMEM
        return 64 * _MiB, 96 * _MiB
    return 22 * _MiB, 48 * _MiB              # v7x class: 64 MiB physical


def _choose_tile_blocks(n_blocks, cap_blocks):
    """Pick the feature-tile width in 128-lane blocks.

    Preference order: padded-traffic waste <= 12.5%  >  grid depth >=
    min(4, n_blocks) (software pipelining + dual-TC sharding)  >  largest tile.
    """
    cap = max(1, min(cap_blocks, n_blocks))
    target_steps = min(4, n_blocks)
    best_tb, best_key = 1, (False, False, 0)
    for tb in range(1, cap + 1):
        steps = _cdiv(n_blocks, tb)
        waste = steps * tb - n_blocks
        key = (waste * 8 <= n_blocks, steps >= target_steps, tb)
        if key > best_key:
            best_tb, best_key = tb, key
    return best_tb


def _sigmoid_eup(z):
    # sigmoid(z) == 0.5 * tanh(0.5 z) + 0.5 : the transcendental goes to the
    # EUP slot instead of a VALU Newton-divide sequence (matters on v7x where
    # per-element VALU headroom at the HBM roofline is ~10 ops).
    return 0.5 * jnp.tanh(0.5 * z) + 0.5


# --------------------------------------------------------------------------- #
# kernels
# --------------------------------------------------------------------------- #
def _dice_fused_kernel(x_ref, gamma_ref, beta_ref, alpha_ref, o_ref):
    """Block = (N, TILE_D): full batch, one feature panel."""
    x = x_ref[...].astype(jnp.float32)                         # (N, TILE_D)
    inv_n = 1.0 / x.shape[0]

    # BatchNorm1d training statistics (biased variance), per feature.
    mean = jnp.sum(x, axis=0, keepdims=True) * inv_n           # (1, TILE_D)
    diff = x - mean
    var = jnp.sum(diff * diff, axis=0, keepdims=True) * inv_n  # (1, TILE_D)
    inv_std = jax.lax.rsqrt(var + EPS)

    # Fold mean into the shift so no (N, TILE_D) temp stays live into the
    # apply phase: normed = (x - mean)*scale + beta = x*scale + shift.
    scale = inv_std * gamma_ref[...]                           # (1, TILE_D)
    shift = beta_ref[...] - mean * scale                       # (1, TILE_D)
    alpha = alpha_ref[...]
    one_minus_alpha = 1.0 - alpha

    normed = x * scale + shift                                 # (N, TILE_D)
    x_p = _sigmoid_eup(normed)
    # Dice gate: alpha*(1-x_p)*x + x_p*x == x * (alpha + x_p*(1-alpha))
    gate = alpha + x_p * one_minus_alpha
    o_ref[...] = (x * gate).astype(o_ref.dtype)


def _dice_stats_kernel(x_ref, sum_ref, ssq_ref):
    """Pass 1 of the large-N path: accumulate per-feature sum / sum(x^2)."""
    @pl.when(pl.program_id(1) == 0)
    def _():
        sum_ref[...] = jnp.zeros_like(sum_ref)
        ssq_ref[...] = jnp.zeros_like(ssq_ref)

    x = x_ref[...].astype(jnp.float32)                         # (TILE_N, TILE_D)
    sum_ref[...] += jnp.sum(x, axis=0, keepdims=True)
    ssq_ref[...] += jnp.sum(x * x, axis=0, keepdims=True)


def _dice_apply_kernel(x_ref, scale_ref, shift_ref, alpha_ref, o_ref):
    """Pass 2 of the large-N path: elementwise gate with precomputed rows."""
    x = x_ref[...].astype(jnp.float32)                         # (TILE_N, TILE_D)
    normed = x * scale_ref[...] + shift_ref[...]
    x_p = _sigmoid_eup(normed)
    gate = alpha_ref[...] + x_p * (1.0 - alpha_ref[...])
    o_ref[...] = (x * gate).astype(o_ref.dtype)


# --------------------------------------------------------------------------- #
# wrappers
# --------------------------------------------------------------------------- #
def _dice_fused(x, gamma, beta, alpha, *, tile_d, sizing_budget, vmem_cap,
                out_dtype):
    n, d = x.shape
    d128 = _round_up(d, _LANE)
    n_blocks = d128 // _LANE

    if tile_d is None:
        # Per grid step: 2x double-buffered x tile + 2x out tile + ~2 tiles of
        # compiler-materialized elementwise intermediates  => ~24*N bytes/lane.
        cap_lanes = max(_LANE, (sizing_budget // (24 * max(n, 1))) // _LANE * _LANE)
        cap_blocks = min(_MAX_TILE_D, cap_lanes) // _LANE
        tile_d = _choose_tile_blocks(n_blocks, cap_blocks) * _LANE
    assert tile_d % _LANE == 0

    d_pad = _round_up(d128, tile_d)
    if d_pad != d:
        x = jnp.pad(x, ((0, 0), (0, d_pad - d)))
        gamma = jnp.pad(gamma, (0, d_pad - d))
        beta = jnp.pad(beta, (0, d_pad - d))
        alpha = jnp.pad(alpha, (0, d_pad - d))

    gamma2 = gamma.reshape(1, d_pad).astype(jnp.float32)
    beta2 = beta.reshape(1, d_pad).astype(jnp.float32)
    alpha2 = alpha.reshape(1, d_pad).astype(jnp.float32)

    grid = (d_pad // tile_d,)
    x_spec = pl.BlockSpec((n, tile_d), lambda j: (0, j))
    row_spec = pl.BlockSpec((1, tile_d), lambda j: (0, j))

    tile_bytes = n * tile_d * 4
    needed = 6 * tile_bytes + 8 * tile_d * 4     # I/O double-buffers + temps + rows
    vmem_limit = int(min(max(needed * 1.5, 16 * _MiB), vmem_cap))

    cost = pl.CostEstimate(
        flops=12 * n * d_pad,
        transcendentals=n * d_pad,
        bytes_accessed=2 * n * d_pad * 4 + 3 * d_pad * 4,
    )

    out = pl.pallas_call(
        _dice_fused_kernel,
        out_shape=jax.ShapeDtypeStruct((n, d_pad), out_dtype),
        grid=grid,
        in_specs=[x_spec, row_spec, row_spec, row_spec],
        out_specs=x_spec,
        compiler_params=pltpu.CompilerParams(
            dimension_semantics=("parallel",),
            vmem_limit_bytes=vmem_limit,
        ),
        cost_estimate=cost,
    )(x, gamma2, beta2, alpha2)

    if d_pad != d:
        out = out[:, :d]
    return out


def _dice_two_pass(x, gamma, beta, alpha, *, tile_n, sizing_budget, vmem_cap,
                   out_dtype):
    """Large-N fallback: stats pass (sum / sum of squares) + apply pass."""
    n, d = x.shape
    d128 = _round_up(d, _LANE)
    n_blocks = d128 // _LANE

    if tile_n is None:
        tile_n = min(512, _round_up(n, _SUBLANE))
    assert tile_n % _SUBLANE == 0
    n_pad = _round_up(n, tile_n)

    cap_lanes = max(_LANE, (sizing_budget // (24 * tile_n)) // _LANE * _LANE)
    cap_blocks = min(_MAX_TILE_D, cap_lanes) // _LANE
    tile_d = _choose_tile_blocks(n_blocks, cap_blocks) * _LANE
    d_pad = _round_up(d128, tile_d)

    if d_pad != d or n_pad != n:
        x = jnp.pad(x, ((0, n_pad - n), (0, d_pad - d)))   # zero rows are inert
    if d_pad != d:
        gamma = jnp.pad(gamma, (0, d_pad - d))
        beta = jnp.pad(beta, (0, d_pad - d))
        alpha = jnp.pad(alpha, (0, d_pad - d))

    grid_d = d_pad // tile_d
    grid_n = n_pad // tile_n
    tile_bytes = tile_n * tile_d * 4

    x_spec = pl.BlockSpec((tile_n, tile_d), lambda j, i: (i, j))
    row_spec = pl.BlockSpec((1, tile_d), lambda j, i: (0, j))

    # ---- pass 1: per-feature sum / sum-of-squares --------------------------
    stats_vmem = int(min(max(4 * tile_bytes, 16 * _MiB), vmem_cap))
    stats_cost = pl.CostEstimate(
        flops=3 * n_pad * d_pad,
        transcendentals=0,
        bytes_accessed=n_pad * d_pad * 4 + 2 * d_pad * 4,
    )
    s, ssq = pl.pallas_call(
        _dice_stats_kernel,
        out_shape=(jax.ShapeDtypeStruct((1, d_pad), jnp.float32),
                   jax.ShapeDtypeStruct((1, d_pad), jnp.float32)),
        grid=(grid_d, grid_n),
        in_specs=[x_spec],
        out_specs=(row_spec, row_spec),
        compiler_params=pltpu.CompilerParams(
            dimension_semantics=("parallel", "arbitrary"),
            vmem_limit_bytes=stats_vmem,
        ),
        cost_estimate=stats_cost,
    )(x)

    # ---- tiny per-feature math (shape (1, D)) in plain JAX -----------------
    inv_n = 1.0 / n
    mean = s * inv_n
    var = jnp.maximum(ssq * inv_n - mean * mean, 0.0)   # biased, clamped >= 0
    inv_std = jax.lax.rsqrt(var + EPS)
    scale = inv_std * gamma.reshape(1, d_pad).astype(jnp.float32)
    shift = beta.reshape(1, d_pad).astype(jnp.float32) - mean * scale
    alpha2 = alpha.reshape(1, d_pad).astype(jnp.float32)

    # ---- pass 2: elementwise Dice gate --------------------------------------
    apply_vmem = int(min(max(9 * tile_bytes, 16 * _MiB), vmem_cap))
    apply_cost = pl.CostEstimate(
        flops=8 * n_pad * d_pad,
        transcendentals=n_pad * d_pad,
        bytes_accessed=2 * n_pad * d_pad * 4 + 3 * d_pad * 4,
    )
    out = pl.pallas_call(
        _dice_apply_kernel,
        out_shape=jax.ShapeDtypeStruct((n_pad, d_pad), out_dtype),
        grid=(grid_d, grid_n),
        in_specs=[x_spec, row_spec, row_spec, row_spec],
        out_specs=x_spec,
        compiler_params=pltpu.CompilerParams(
            dimension_semantics=("parallel", "parallel"),
            vmem_limit_bytes=apply_vmem,
        ),
        cost_estimate=apply_cost,
    )(x, scale, shift, alpha2)

    if n_pad != n or d_pad != d:
        out = out[:n, :d]
    return out


def dice_activation(x, gamma, beta, alpha, *, tile_d=None, tile_n=None,
                    two_pass=None):
    """Dice activation. x: (N, D); gamma/beta/alpha: (D,). Returns (N, D)."""
    n, d = x.shape
    out_dtype = x.dtype
    sizing_budget, vmem_cap = _vmem_budgets()

    if two_pass is None:
        # Fall back to the two-level scheme when even a 128-lane fused panel
        # (plus double-buffers and intermediates) would not fit the budget.
        two_pass = 24 * max(n, 1) * _LANE > sizing_budget

    if two_pass:
        return _dice_two_pass(x, gamma, beta, alpha, tile_n=tile_n,
                              sizing_budget=sizing_budget, vmem_cap=vmem_cap,
                              out_dtype=out_dtype)
    return _dice_fused(x, gamma, beta, alpha, tile_d=tile_d,
                       sizing_budget=sizing_budget, vmem_cap=vmem_cap,
                       out_dtype=out_dtype)


# --------------------------------------------------------------------------- #
# reference + tests
# --------------------------------------------------------------------------- #
def dice_reference(x, gamma, beta, alpha):
    mean = jnp.mean(x, axis=0, keepdims=True)
    var = jnp.mean((x - mean) ** 2, axis=0, keepdims=True)
    normed = (x - mean) / jnp.sqrt(var + EPS) * gamma[None, :] + beta[None, :]
    x_p = jax.nn.sigmoid(normed)
    return alpha[None, :] * (1.0 - x_p) * x + x_p * x


if __name__ == "__main__":
    key = jax.random.PRNGKey(0)
    # Tolerance allows for the EUP tanh-based sigmoid; algorithmic errors
    # (wrong mean/var/gate) would show up orders of magnitude larger.
    ATOL, RTOL = 2e-4, 2e-4

    # ---- test 1: module-init parameters, small shapes, fused path ----------
    batch, input_dim = 8, 32
    k1, k2, k3, k4, k5 = jax.random.split(key, 5)
    x = jax.random.normal(k1, (batch, input_dim), dtype=jnp.float32)
    gamma = jnp.ones((input_dim,), dtype=jnp.float32)    # BatchNorm1d.weight init
    beta = jnp.zeros((input_dim,), dtype=jnp.float32)    # BatchNorm1d.bias init
    alpha = jnp.zeros((input_dim,), dtype=jnp.float32)   # Dice alpha init

    out = jax.block_until_ready(dice_activation(x, gamma, beta, alpha))
    ref = dice_reference(x, gamma, beta, alpha)
    assert out.shape == x.shape and out.dtype == x.dtype
    assert jnp.allclose(out, ref, atol=ATOL, rtol=RTOL), "mismatch (test 1)"

    # ---- test 2: multi-tile fused grid, padded D, non-multiple-of-8 batch ---
    n2, d2 = 10, 200                      # D pads to 256 -> grid of 2, tile 128
    x2 = jax.random.normal(k2, (n2, d2), dtype=jnp.float32)
    gamma2 = 1.0 + 0.1 * jax.random.normal(k3, (d2,), dtype=jnp.float32)
    beta2 = 0.1 * jax.random.normal(k4, (d2,), dtype=jnp.float32)
    alpha2 = 0.1 * jax.random.normal(k5, (d2,), dtype=jnp.float32)

    out2 = jax.block_until_ready(dice_activation(x2, gamma2, beta2, alpha2))
    ref2 = dice_reference(x2, gamma2, beta2, alpha2)
    assert out2.shape == x2.shape and out2.dtype == x2.dtype
    assert jnp.allclose(out2, ref2, atol=ATOL, rtol=RTOL), "mismatch (test 2)"

    # ---- test 3: force the large-N two-pass path (multi-step N reduction) ---
    n3, d3 = 20, 200                      # tile_n=8 -> n_pad=24, 3 N-steps
    x3 = jax.random.normal(k2, (n3, d3), dtype=jnp.float32)
    out3 = jax.block_until_ready(
        dice_activation(x3, gamma2, beta2, alpha2, two_pass=True, tile_n=8))
    ref3 = dice_reference(x3, gamma2, beta2, alpha2)
    assert out3.shape == x3.shape and out3.dtype == x3.dtype
    assert jnp.allclose(out3, ref3, atol=ATOL, rtol=RTOL), "mismatch (test 3)"

    print("KERNEL_OK")
</pallas_src>

<mosaic_0001>
module attributes {stable_mosaic.version = 11 : i64} {
  func.func @_dice_fused_kernel(%arg0: i32, %arg1: memref<8x128xf32, #tpu.memory_space<vmem>>, %arg2: memref<1x128xf32, #tpu.memory_space<vmem>>, %arg3: memref<1x128xf32, #tpu.memory_space<vmem>>, %arg4: memref<1x128xf32, #tpu.memory_space<vmem>>, %arg5: memref<8x128xf32, #tpu.memory_space<vmem>>) attributes {dimension_semantics = [#tpu.dimension_semantics<parallel>], iteration_bounds = array<i64: 1>, scalar_prefetch = 0 : i64, scratch_operands = 0 : i64, tpu.core_type = #tpu.core_type<tc>, window_params = [{transform_indices = @transform_0, window_bounds = array<i64: 8, 128>}, {transform_indices = @transform_1, window_bounds = array<i64: 1, 128>}, {transform_indices = @transform_2, window_bounds = array<i64: 1, 128>}, {transform_indices = @transform_3, window_bounds = array<i64: 1, 128>}, {transform_indices = @transform_4, window_bounds = array<i64: 8, 128>}]} {
    %c0 = arith.constant 0 : index
    %c0_0 = arith.constant 0 : index
    %0 = vector.load %arg1[%c0, %c0_0] : memref<8x128xf32, #tpu.memory_space<vmem>>, vector<8x128xf32>
    %cst = arith.constant dense<0.000000e+00> : vector<128xf32>
    %1 = vector.multi_reduction <add>, %0, %cst [0] : vector<8x128xf32> to vector<128xf32>
    %2 = vector.shape_cast %1 : vector<128xf32> to vector<1x128xf32>
    %cst_1 = arith.constant 1.250000e-01 : f32
    %3 = vector.broadcast %cst_1 : f32 to vector<1x128xf32>
    %4 = arith.mulf %2, %3 : vector<1x128xf32>
    %5 = vector.broadcast %4 : vector<1x128xf32> to vector<8x128xf32>
    %6 = arith.subf %0, %5 : vector<8x128xf32>
    %7 = arith.mulf %6, %6 : vector<8x128xf32>
    %cst_2 = arith.constant dense<0.000000e+00> : vector<128xf32>
    %8 = vector.multi_reduction <add>, %7, %cst_2 [0] : vector<8x128xf32> to vector<128xf32>
    %9 = vector.shape_cast %8 : vector<128xf32> to vector<1x128xf32>
    %cst_3 = arith.constant 1.250000e-01 : f32
    %10 = vector.broadcast %cst_3 : f32 to vector<1x128xf32>
    %11 = arith.mulf %9, %10 : vector<1x128xf32>
    %cst_4 = arith.constant 9.99999974E-6 : f32
    %12 = vector.broadcast %cst_4 : f32 to vector<1x128xf32>
    %13 = arith.addf %11, %12 : vector<1x128xf32>
    %14 = math.rsqrt %13 : vector<1x128xf32>
    %c0_5 = arith.constant 0 : index
    %c0_6 = arith.constant 0 : index
    %15 = vector.load %arg2[%c0_5, %c0_6] : memref<1x128xf32, #tpu.memory_space<vmem>>, vector<1x128xf32>
    %16 = arith.mulf %14, %15 : vector<1x128xf32>
    %c0_7 = arith.constant 0 : index
    %c0_8 = arith.constant 0 : index
    %17 = vector.load %arg3[%c0_7, %c0_8] : memref<1x128xf32, #tpu.memory_space<vmem>>, vector<1x128xf32>
    %18 = arith.mulf %4, %16 : vector<1x128xf32>
    %19 = arith.subf %17, %18 : vector<1x128xf32>
    %c0_9 = arith.constant 0 : index
    %c0_10 = arith.constant 0 : index
    %20 = vector.load %arg4[%c0_9, %c0_10] : memref<1x128xf32, #tpu.memory_space<vmem>>, vector<1x128xf32>
    %cst_11 = arith.constant 1.000000e+00 : f32
    %21 = vector.broadcast %cst_11 : f32 to vector<1x128xf32>
    %22 = arith.subf %21, %20 : vector<1x128xf32>
    %23 = vector.broadcast %16 : vector<1x128xf32> to vector<8x128xf32>
    %24 = arith.mulf %0, %23 : vector<8x128xf32>
    %25 = vector.broadcast %19 : vector<1x128xf32> to vector<8x128xf32>
    %26 = arith.addf %24, %25 : vector<8x128xf32>
    %cst_12 = arith.constant 5.000000e-01 : f32
    %27 = vector.broadcast %cst_12 : f32 to vector<8x128xf32>
    %28 = arith.mulf %27, %26 : vector<8x128xf32>
    %29 = math.tanh %28 : vector<8x128xf32>
    %cst_13 = arith.constant 5.000000e-01 : f32
    %30 = vector.broadcast %cst_13 : f32 to vector<8x128xf32>
    %31 = arith.mulf %30, %29 : vector<8x128xf32>
    %cst_14 = arith.constant 5.000000e-01 : f32
    %32 = vector.broadcast %cst_14 : f32 to vector<8x128xf32>
    %33 = arith.addf %31, %32 : vector<8x128xf32>
    %34 = vector.broadcast %22 : vector<1x128xf32> to vector<8x128xf32>
    %35 = arith.mulf %33, %34 : vector<8x128xf32>
    %36 = vector.broadcast %20 : vector<1x128xf32> to vector<8x128xf32>
    %37 = arith.addf %36, %35 : vector<8x128xf32>
    %38 = arith.mulf %0, %37 : vector<8x128xf32>
    %c0_15 = arith.constant 0 : index
    %c0_16 = arith.constant 0 : index
    %39 = vector.load %arg5[%c0_15, %c0_16] : memref<8x128xf32, #tpu.memory_space<vmem>>, vector<8x128xf32>
    tpu.vector_store %arg5[%c0_15, %c0_16], %38 {strides = array<i32>} : memref<8x128xf32, #tpu.memory_space<vmem>>, vector<8x128xf32>,
    return
  }
  func.func @transform_0(%arg0: i32) -> (i32, i32) {
    %c0_i32 = arith.constant 0 : i32
    %c0_i32_0 = arith.constant 0 : i32
    return %c0_i32, %arg0 : i32, i32
  }
  func.func @transform_1(%arg0: i32) -> (i32, i32) {
    %c0_i32 = arith.constant 0 : i32
    %c0_i32_0 = arith.constant 0 : i32
    return %c0_i32, %arg0 : i32, i32
  }
  func.func @transform_2(%arg0: i32) -> (i32, i32) {
    %c0_i32 = arith.constant 0 : i32
    %c0_i32_0 = arith.constant 0 : i32
    return %c0_i32, %arg0 : i32, i32
  }
  func.func @transform_3(%arg0: i32) -> (i32, i32) {
    %c0_i32 = arith.constant 0 : i32
    %c0_i32_0 = arith.constant 0 : i32
    return %c0_i32, %arg0 : i32, i32
  }
  func.func @transform_4(%arg0: i32) -> (i32, i32) {
    %c0_i32 = arith.constant 0 : i32
    %c0_i32_0 = arith.constant 0 : i32
    return %c0_i32, %arg0 : i32, i32
  }
}

</mosaic_0001>

<llo_original>
// kernel: tpu_custom_call.1
$region0: #{tpu_custom_call.1}
  #allocation0 [shape = 'u32[]', space=smem, size = 0x4, offset = 0x4, fixed_abs, tag = 'smem constant byte address 0x4 - core index']
  #allocation1 [shape = 'u32[144,128]{1,0:T(1,128)}', space=vmem, size = 0x12000, scoped, tag = 'internal scratch']
  %s0 = inlined_call_operand.hbm [shape: f32[8,128], index: 0, kind: input, shape index: {}]
  %s1 = inlined_call_operand.vmem [shape: f32[1,128], index: 1, kind: input, shape index: {}]
  %s2 = inlined_call_operand.vmem [shape: f32[1,128], index: 2, kind: input, shape index: {}]
  %s3 = inlined_call_operand.vmem [shape: f32[1,128], index: 3, kind: input, shape index: {}]
  %s4 = inlined_call_operand.hbm [shape: f32[8,128], index: 4, kind: output, shape index: {}]
  %s5 = sld [smem:[#allocation0]]
  $region30: #{tpu_custom_call.1} parent=0
    _
  %s7 = ssub.s32 1, %s5
  %s8 = scalar_select 0, %s7, %s5
  $region1: #{tpu_custom_call.1} parent=0
    #allocation2 [shape = 'u8[4096]{0}', space=vmem, size = 0x1000, scoped, tag = 'input window, operand 0, single buffered']
    #allocation3 [shape = 's32[1]{0}', space=sflag, size = 0x4, scoped, tag = 'scoped memory for tpu_custom_call.1']
    #allocation4 [shape = 's32[1]{0}', space=sflag, size = 0x4, scoped, tag = 'scoped memory for tpu_custom_call.1']
    #allocation5 [shape = 'u8[4096]{0}', space=vmem, size = 0x1000, scoped, tag = 'output window, operand 0, single buffered']
    %9 = vsyncpa [#allocation3], 0
    %10 = vsyncpa [#allocation4], 0
    // Predicated region
    $region2: #{tpu_custom_call.1} parent=1 // pred_check
      _
    $region3: #{tpu_custom_call.1} parent=1 // pred_check_branch
      %12 = sbr.rel (0) target = $region5
    $region4: #{tpu_custom_call.1} parent=1 // pred_region
      %s14 = ssub.s32 128, 128
      %15 = vsyncadd [#allocation3], %s14
      %s17 = sshll.u32 [#allocation2], 4
      %s18 = int_to_ptr.vmem [resolvable:$true] %s17
      %20 = dma.hbm_to_vmem [thread:$0]  %s0, 128, %s18, [#allocation3]
    $region5: #{tpu_custom_call.1} parent=1 // pred_fallthru
      _
    // Predicated region
    $region6: #{tpu_custom_call.1} parent=1 // pred_check
      _
    $region7: #{tpu_custom_call.1} parent=1 // pred_check_branch
      %22 = sbr.rel (0) target = $region9
    $region8: #{tpu_custom_call.1} parent=1 // pred_region
      _
    $region9: #{tpu_custom_call.1} parent=1 // pred_fallthru
      _
    // Predicated region
    $region10: #{tpu_custom_call.1} parent=1 // pred_check
      _
    $region11: #{tpu_custom_call.1} parent=1 // pred_check_branch
      %24 = sbr.rel (0) target = $region13
    $region12: #{tpu_custom_call.1} parent=1 // pred_region
      _
    $region13: #{tpu_custom_call.1} parent=1 // pred_fallthru
      _
    // Predicated region
    $region14: #{tpu_custom_call.1} parent=1 // pred_check
      _
    $region15: #{tpu_custom_call.1} parent=1 // pred_check_branch
      %26 = sbr.rel (0) target = $region17
    $region16: #{tpu_custom_call.1} parent=1 // pred_region
      _
    $region17: #{tpu_custom_call.1} parent=1 // pred_fallthru
      _
    // Predicated region
    $region18: #{tpu_custom_call.1} parent=1 // pred_check
      _
    $region19: #{tpu_custom_call.1} parent=1 // pred_check_branch
      %28 = sbr.rel (0) target = $region21
    $region20: #{tpu_custom_call.1} parent=1 // pred_region
      %29 = dma.done [#allocation3], 128
    $region21: #{tpu_custom_call.1} parent=1 // pred_fallthru
      _
    %v30 = vld [vmem:[#allocation2] sm:$0xff]
    %v31 = vrot.slane %v30, 4
    %v32 = vadd.f32 %v30, %v31
    %v33 = vrot.slane %v32, 2
    %v34 = vadd.f32 %v32, %v33
    %v35 = vrot.slane %v34, 1
    %v36 = vadd.f32 %v34, %v35
    %v37 = vmul.f32 %v36, 0.125
    %v38 = vsub.f32 %v30, %v37
    %v39 = vmul.f32 %v38, %v38
    %v40 = vrot.slane %v39, 4
    %v41 = vadd.f32 %v39, %v40
    %v42 = vrot.slane %v41, 2
    %v43 = vadd.f32 %v41, %v42
    %v44 = vrot.slane %v43, 1
    %v45 = vadd.f32 %v43, %v44
    %v46 = vmul.f32 %v45, 0.125
    %v47 = vadd.f32 %v46, 1e-05
    %v48 = vrsqrt.pop %v47
    %v49 = vld [vmem:[%s1] sm:$0x1]
    %v50 = vmul.f32 %v48, %v49
    %v51 = vld [vmem:[%s2] sm:$0x1]
    %v52 = vmul.f32 %v37, %v50
    %v53 = vsub.f32 %v51, %v52
    %v54 = vld [vmem:[%s3] sm:$0x1]
    %v55 = vsub.f32 1.0, %v54
    %v56 = vlaneseq
    %v57 = vshrl.u32 %v56, 7
    %v58 = vsub.s32 0, %v57
    %v59 = vrot.slane %v50, %v58
    %v60 = vmul.f32 %v30, %v59
    %v62 = vlaneseq
    %v63 = vshrl.u32 %v62, 7
    %v64 = vsub.s32 0, %v63
    %v65 = vrot.slane %v53, %v64
    %v67 = vadd.f32 %v60, %v65
    %v68 = vmul.f32 %v67, 0.5
    %v69 = vtanh.pop %v68
    %v70 = vmul.f32 %v69, 0.5
    %v71 = vadd.f32 %v70, 0.5
    %v73 = vlaneseq
    %v74 = vshrl.u32 %v73, 7
    %v75 = vsub.s32 0, %v74
    %v76 = vrot.slane %v55, %v75
    %v78 = vmul.f32 %v71, %v76
    %v80 = vlaneseq
    %v81 = vshrl.u32 %v80, 7
    %v82 = vsub.s32 0, %v81
    %v83 = vrot.slane %v54, %v82
    %v85 = vadd.f32 %v83, %v78
    %v86 = vmul.f32 %v30, %v85
    %87 = vst [vmem:[#allocation5] sm:$0xff] %v86
    // Predicated region
    $region22: #{tpu_custom_call.1} parent=1 // pred_check
      _
    $region23: #{tpu_custom_call.1} parent=1 // pred_check_branch
      %89 = sbr.rel (0) target = $region25
    $region24: #{tpu_custom_call.1} parent=1 // pred_region
      %s91 = ssub.s32 128, 128
      %92 = vsyncadd [#allocation4], %s91
      %s94 = sshll.u32 [#allocation5], 4
      %s95 = int_to_ptr.vmem [resolvable:$true] %s94
      %97 = dma.vmem_to_hbm [thread:$0]  %s95, 128, %s4, [#allocation4]
    $region25: #{tpu_custom_call.1} parent=1 // pred_fallthru
      _
    // Predicated region
    $region26: #{tpu_custom_call.1} parent=1 // pred_check
      _
    $region27: #{tpu_custom_call.1} parent=1 // pred_check_branch
      %99 = sbr.rel (0) target = $region29
    $region28: #{tpu_custom_call.1} parent=1 // pred_region
      %100 = dma.done [#allocation4], 128
    $region29: #{tpu_custom_call.1} parent=1 // pred_fallthru
      _
    %101 = vsyncpa [#allocation3], 1
    %102 = vsyncpa [#allocation4], 1

</llo_original>
